<compile_context>
chip_gen: v7x
topology: tpu7x:2x2x1
jax: 0.10.0
libtpu: 0.0.40
codegen_flags: <defaults>
</compile_context>

<pallas_src>
import functools

import jax
import jax.numpy as jnp
import numpy as np
from jax.experimental import pallas as pl
from jax.experimental.pallas import tpu as pltpu

EPS = 1e-5
NEG_SLOPE = 0.2
LANE = 128
NCORES = 2        # leading grid axis for v7x megacore; harmless on v5e/v6e
STATS_ROWS = 8    # per-core stats rows padded to a full (8, 128) sublane tile


def _round_up(x, m):
    return (x + m - 1) // m * m


# ------------------------------ pass-1 kernels ------------------------------
def _conv_y_stats_kernel(p_ref, w_ref, y_ref, stats_ref):
    """Materialize variant: conv tile (bf16 in, f32 MXU acc), write bf16 y and
    accumulate per-channel sum / sum-of-squares into the per-core stats block."""
    y = jnp.dot(p_ref[...], w_ref[...], preferred_element_type=jnp.float32)
    y_ref[...] = y.astype(y_ref.dtype)

    @pl.when(pl.program_id(1) == 0)
    def _init():
        stats_ref[...] = jnp.zeros_like(stats_ref)

    stats_ref[0:1, :] += jnp.sum(y, axis=0, keepdims=True)        # row 0: sum
    stats_ref[1:2, :] += jnp.sum(y * y, axis=0, keepdims=True)    # row 1: sumsq


def _stats_only_kernel(p_ref, w_ref, stats_ref):
    """Recompute variant pass 1: statistics only, y never touches HBM."""
    y = jnp.dot(p_ref[...], w_ref[...], preferred_element_type=jnp.float32)

    @pl.when(pl.program_id(1) == 0)
    def _init():
        stats_ref[...] = jnp.zeros_like(stats_ref)

    stats_ref[0:1, :] += jnp.sum(y, axis=0, keepdims=True)
    stats_ref[1:2, :] += jnp.sum(y * y, axis=0, keepdims=True)


# ------------------------------ pass-2 kernels ------------------------------
def _bn_lrelu_kernel(y_ref, a_ref, b_ref, o_ref):
    """Materialize variant pass 2: folded BN affine + LeakyReLU on bf16 y."""
    z = y_ref[...].astype(jnp.float32) * a_ref[...] + b_ref[...]
    o_ref[...] = jnp.where(z > 0, z, NEG_SLOPE * z).astype(o_ref.dtype)


def _conv_bn_lrelu_kernel(p_ref, w_ref, a_ref, b_ref, o_ref):
    """Recompute variant pass 2: redo the conv matmul, then BN affine + LReLU."""
    y = jnp.dot(p_ref[...], w_ref[...], preferred_element_type=jnp.float32)
    z = y * a_ref[...] + b_ref[...]
    o_ref[...] = jnp.where(z > 0, z, NEG_SLOPE * z).astype(o_ref.dtype)


# --------------------------------- wrapper ----------------------------------
def conv2d_block(x, weight, gamma, beta, *, stride=2, padding=1, tm=512,
                 variant="auto", output_layout="NCHW", out_dtype=jnp.float32,
                 vmem_limit_bytes=48 << 20):
    """x: (N, Cin, H, W); weight: (Cout, Cin, k, k); gamma/beta: (Cout,).
    Returns the Conv+BN(train)+LeakyReLU activation, NCHW f32 by default
    (set output_layout="NHWC" / out_dtype=bf16 when chaining blocks)."""
    N, Cin, H, W = x.shape
    Cout, _, k, _ = weight.shape
    Ho = (H + 2 * padding - k) // stride + 1
    Wo = (W + 2 * padding - k) // stride + 1
    M = N * Ho * Wo
    K = Cin * k * k

    # ---- im2col in bf16 (halves the dominant HBM stream), NHWC-based so the
    # big patch tensor never needs its own transpose. K-order is (Cin, kh, kw)
    # to match the OIHW weight reshape below.
    xb = x.astype(jnp.bfloat16).transpose(0, 2, 3, 1)                  # (N,H,W,Cin)
    xp = jnp.pad(xb, ((0, 0), (padding, padding), (padding, padding), (0, 0)))
    cols = [xp[:, di:di + stride * Ho:stride, dj:dj + stride * Wo:stride, :]
            for di in range(k) for dj in range(k)]                     # (N,Ho,Wo,Cin) each
    patches = jnp.stack(cols, axis=-1).reshape(M, K)                   # (M, Cin*k*k)

    # ---- lane/sublane-friendly padding ----
    Cp = _round_up(Cout, LANE)                  # lane-dense output channels
    TM = min(tm, _round_up(M, 16))              # rows/tile: bf16 sublane multiple
    Mp = _round_up(M, NCORES * TM)              # split evenly across the core axis
    tiles_per_core = Mp // (NCORES * TM)
    n_tiles = Mp // TM

    patches = jnp.pad(patches, ((0, Mp - M), (0, 0)))   # zero rows -> zero stats
    w2d = weight.astype(jnp.bfloat16).reshape(Cout, K).T                # (K, Cout)
    w2d = jnp.pad(w2d, ((0, 0), (0, Cp - Cout)))                        # (K, Cp)
    gamma_p = jnp.pad(gamma.astype(jnp.float32), (0, Cp - Cout))        # padded lanes
    beta_p = jnp.pad(beta.astype(jnp.float32), (0, Cp - Cout))          # stay exactly 0

    if variant == "auto":
        # bf16-y round trip costs ~4*Cp bytes/row; re-reading the bf16 patches
        # in pass 2 costs ~2*K bytes/row  ->  recompute wins when K < 2*Cp.
        variant = "recompute" if K < 2 * Cp else "materialize"

    pass1_params = pltpu.CompilerParams(
        dimension_semantics=("parallel", "arbitrary"),   # core axis / stats axis
        vmem_limit_bytes=vmem_limit_bytes)
    pass2_params = pltpu.CompilerParams(
        dimension_semantics=("parallel",),
        vmem_limit_bytes=vmem_limit_bytes)

    # ---- pass 1: conv matmul (+ optional bf16 y) + per-core sum / sumsq ----
    p_spec1 = pl.BlockSpec((TM, K), lambda c, i: (c * tiles_per_core + i, 0))
    w_spec1 = pl.BlockSpec((K, Cp), lambda c, i: (0, 0))
    stats_spec = pl.BlockSpec((STATS_ROWS, Cp), lambda c, i: (c, 0))
    stats_shape = jax.ShapeDtypeStruct((NCORES * STATS_ROWS, Cp), jnp.float32)

    if variant == "materialize":
        y2d, stats_raw = pl.pallas_call(
            _conv_y_stats_kernel,
            out_shape=(jax.ShapeDtypeStruct((Mp, Cp), jnp.bfloat16), stats_shape),
            grid=(NCORES, tiles_per_core),
            in_specs=[p_spec1, w_spec1],
            out_specs=(pl.BlockSpec((TM, Cp),
                                    lambda c, i: (c * tiles_per_core + i, 0)),
                       stats_spec),
            compiler_params=pass1_params,
        )(patches, w2d)
    else:
        stats_raw = pl.pallas_call(
            _stats_only_kernel,
            out_shape=stats_shape,
            grid=(NCORES, tiles_per_core),
            in_specs=[p_spec1, w_spec1],
            out_specs=stats_spec,
            compiler_params=pass1_params,
        )(patches, w2d)
        y2d = None

    # ---- fold training-mode BN into a single affine (tiny (Cp,) ops) ----
    stats = stats_raw.reshape(NCORES, STATS_ROWS, Cp).sum(axis=0)   # reduce cores
    inv_m = jnp.float32(1.0 / M)                 # padded rows contributed zero
    mean = stats[0] * inv_m
    var = jnp.maximum(stats[1] * inv_m - mean * mean, 0.0)   # biased, as in PyTorch
    a = (gamma_p * jax.lax.rsqrt(var + EPS)).reshape(1, Cp)
    b = (beta_p - mean * a[0]).reshape(1, Cp)

    # ---- pass 2: (recompute conv +) BN affine + LeakyReLU, parallel over M ----
    ab_spec = pl.BlockSpec((1, Cp), lambda i: (0, 0))
    out_spec = pl.BlockSpec((TM, Cp), lambda i: (i, 0))

    if variant == "materialize":
        out2d = pl.pallas_call(
            _bn_lrelu_kernel,
            out_shape=jax.ShapeDtypeStruct((Mp, Cp), out_dtype),
            grid=(n_tiles,),
            in_specs=[pl.BlockSpec((TM, Cp), lambda i: (i, 0)), ab_spec, ab_spec],
            out_specs=out_spec,
            compiler_params=pass2_params,
        )(y2d, a, b)
    else:
        out2d = pl.pallas_call(
            _conv_bn_lrelu_kernel,
            out_shape=jax.ShapeDtypeStruct((Mp, Cp), out_dtype),
            grid=(n_tiles,),
            in_specs=[pl.BlockSpec((TM, K), lambda i: (i, 0)),
                      pl.BlockSpec((K, Cp), lambda i: (0, 0)),
                      ab_spec, ab_spec],
            out_specs=out_spec,
            compiler_params=pass2_params,
        )(patches, w2d, a, b)

    out = out2d[:M, :Cout].reshape(N, Ho, Wo, Cout)
    if output_layout == "NCHW":                  # match the PyTorch module
        out = out.transpose(0, 3, 1, 2)
    return out


# -------------------------------- reference ---------------------------------
def _reference(x, weight, gamma, beta, *, stride=2, padding=1):
    """Pure-JAX reference mirroring the PyTorch module (training-mode BN)."""
    y = jax.lax.conv_general_dilated(
        x.astype(jnp.float32), weight.astype(jnp.float32),
        window_strides=(stride, stride),
        padding=[(padding, padding), (padding, padding)],
        dimension_numbers=("NCHW", "OIHW", "NCHW"),
    )
    mean = jnp.mean(y, axis=(0, 2, 3), keepdims=True)
    var = jnp.mean((y - mean) ** 2, axis=(0, 2, 3), keepdims=True)
    y_hat = (y - mean) * jax.lax.rsqrt(var + EPS)
    z = y_hat * gamma.reshape(1, -1, 1, 1) + beta.reshape(1, -1, 1, 1)
    return jnp.where(z > 0, z, NEG_SLOPE * z)


if __name__ == "__main__":
    # Small deterministic setup consistent with the module's forward.
    N, Cin, H, W = 2, 4, 16, 16
    Cout, k, stride, padding = 8, 4, 2, 1

    key = jax.random.PRNGKey(0)
    kx, kw = jax.random.split(key)
    x = jax.random.normal(kx, (N, Cin, H, W), dtype=jnp.float32)
    # DCGAN-style init for the conv weight; BN params at their defaults.
    weight = 0.02 * jax.random.normal(kw, (Cout, Cin, k, k), dtype=jnp.float32)
    gamma = jnp.ones((Cout,), dtype=jnp.float32)
    beta = jnp.zeros((Cout,), dtype=jnp.float32)

    ref = jax.block_until_ready(
        _reference(x, weight, gamma, beta, stride=stride, padding=padding))

    # Default path: auto-selects the recompute variant for this small-K layer.
    fn_auto = jax.jit(functools.partial(conv2d_block, stride=stride, padding=padding))
    out_auto = jax.block_until_ready(fn_auto(x, weight, gamma, beta))
    np.testing.assert_allclose(np.asarray(out_auto), np.asarray(ref),
                               rtol=2e-2, atol=2e-2)

    # Materialize path (bf16 intermediate y), used for large-K layers.
    fn_mat = jax.jit(functools.partial(conv2d_block, stride=stride, padding=padding,
                                       variant="materialize"))
    out_mat = jax.block_until_ready(fn_mat(x, weight, gamma, beta))
    np.testing.assert_allclose(np.asarray(out_mat), np.asarray(ref),
                               rtol=2e-2, atol=2e-2)

    print("KERNEL_OK")
</pallas_src>

<mosaic_0001>
module attributes {stable_mosaic.version = 11 : i64} {
  func.func @_stats_only_kernel(%arg0: i32, %arg1: i32, %arg2: memref<128x64xbf16, #tpu.memory_space<vmem>>, %arg3: memref<64x128xbf16, #tpu.memory_space<vmem>>, %arg4: memref<8x128xf32, #tpu.memory_space<vmem>>) attributes {dimension_semantics = [#tpu.dimension_semantics<parallel>, #tpu.dimension_semantics<arbitrary>], iteration_bounds = array<i64: 2, 1>, scalar_prefetch = 0 : i64, scratch_operands = 0 : i64, tpu.core_type = #tpu.core_type<tc>, window_params = [{transform_indices = @transform_0, window_bounds = array<i64: 128, 64>}, {pipeline_mode = #tpu.pipeline_mode<synchronous>, transform_indices = @transform_1, window_bounds = array<i64: 64, 128>}, {transform_indices = @transform_2, window_bounds = array<i64: 8, 128>}]} {
    %c0 = arith.constant 0 : index
    %c0_0 = arith.constant 0 : index
    %0 = vector.load %arg2[%c0, %c0_0] : memref<128x64xbf16, #tpu.memory_space<vmem>>, vector<128x64xbf16>
    %c0_1 = arith.constant 0 : index
    %c0_2 = arith.constant 0 : index
    %1 = vector.load %arg3[%c0_1, %c0_2] : memref<64x128xbf16, #tpu.memory_space<vmem>>, vector<64x128xbf16>
    %cst = arith.constant dense<0.000000e+00> : vector<128x128xf32>
    %2 = tpu.matmul %0, %1, %cst {dimension_numbers = #tpu.dot_dimension_numbers<[1], [0], [0], [1], [0, 0, 1, 1], [], []>} : vector<128x64xbf16>, vector<64x128xbf16>, vector<128x128xf32> -> vector<128x128xf32>
    %c0_i32 = arith.constant 0 : i32
    %3 = arith.cmpi eq, %arg1, %c0_i32 : i32
    %4 = arith.extui %3 : i1 to i32
    %c0_i32_3 = arith.constant 0 : i32
    %5 = arith.cmpi ne, %4, %c0_i32_3 : i32
    scf.if %5 {
      %cst_13 = arith.constant 0.000000e+00 : f32
      %17 = vector.broadcast %cst_13 : f32 to vector<8x128xf32>
      %c0_14 = arith.constant 0 : index
      %c0_15 = arith.constant 0 : index
      %18 = vector.load %arg4[%c0_14, %c0_15] : memref<8x128xf32, #tpu.memory_space<vmem>>, vector<8x128xf32>
      tpu.vector_store %arg4[%c0_14, %c0_15], %17 {strides = array<i32>} : memref<8x128xf32, #tpu.memory_space<vmem>>, vector<8x128xf32>,
    } else {
    }
    %c0_4 = arith.constant 0 : index
    %c0_5 = arith.constant 0 : index
    %6 = vector.load %arg4[%c0_4, %c0_5] : memref<8x128xf32, #tpu.memory_space<vmem>>, vector<1x128xf32>
    %cst_6 = arith.constant dense<0.000000e+00> : vector<128xf32>
    %7 = vector.multi_reduction <add>, %2, %cst_6 [0] : vector<128x128xf32> to vector<128xf32>
    %8 = vector.shape_cast %7 : vector<128xf32> to vector<1x128xf32>
    %9 = arith.addf %6, %8 : vector<1x128xf32>
    %c0_7 = arith.constant 0 : index
    %c0_8 = arith.constant 0 : index
    %10 = vector.load %arg4[%c0_7, %c0_8] : memref<8x128xf32, #tpu.memory_space<vmem>>, vector<1x128xf32>
    tpu.vector_store %arg4[%c0_7, %c0_8], %9 {strides = array<i32>} : memref<8x128xf32, #tpu.memory_space<vmem>>, vector<1x128xf32>,
    %c1 = arith.constant 1 : index
    %c0_9 = arith.constant 0 : index
    %11 = vector.load %arg4[%c1, %c0_9] : memref<8x128xf32, #tpu.memory_space<vmem>>, vector<1x128xf32>
    %12 = arith.mulf %2, %2 : vector<128x128xf32>
    %cst_10 = arith.constant dense<0.000000e+00> : vector<128xf32>
    %13 = vector.multi_reduction <add>, %12, %cst_10 [0] : vector<128x128xf32> to vector<128xf32>
    %14 = vector.shape_cast %13 : vector<128xf32> to vector<1x128xf32>
    %15 = arith.addf %11, %14 : vector<1x128xf32>
    %c1_11 = arith.constant 1 : index
    %c0_12 = arith.constant 0 : index
    %16 = vector.load %arg4[%c1_11, %c0_12] : memref<8x128xf32, #tpu.memory_space<vmem>>, vector<1x128xf32>
    tpu.vector_store %arg4[%c1_11, %c0_12], %15 {strides = array<i32>} : memref<8x128xf32, #tpu.memory_space<vmem>>, vector<1x128xf32>,
    return
  }
  func.func @transform_0(%arg0: i32, %arg1: i32) -> (i32, i32) {
    %c1_i32 = arith.constant 1 : i32
    %0 = arith.muli %arg0, %c1_i32 : i32
    %1 = arith.addi %0, %arg1 : i32
    %c0_i32 = arith.constant 0 : i32
    %c0_i32_0 = arith.constant 0 : i32
    return %1, %c0_i32 : i32, i32
  }
  func.func @transform_1(%arg0: i32, %arg1: i32) -> (i32, i32) {
    %c0_i32 = arith.constant 0 : i32
    %c0_i32_0 = arith.constant 0 : i32
    %c0_i32_1 = arith.constant 0 : i32
    return %c0_i32, %c0_i32_0 : i32, i32
  }
  func.func @transform_2(%arg0: i32, %arg1: i32) -> (i32, i32) {
    %c0_i32 = arith.constant 0 : i32
    %c0_i32_0 = arith.constant 0 : i32
    return %arg0, %c0_i32 : i32, i32
  }
}

module attributes {stable_mosaic.version = 11 : i64} {
  func.func @_conv_bn_lrelu_kernel(%arg0: i32, %arg1: memref<128x64xbf16, #tpu.memory_space<vmem>>, %arg2: memref<64x128xbf16, #tpu.memory_space<vmem>>, %arg3: memref<1x128xf32, #tpu.memory_space<vmem>>, %arg4: memref<1x128xf32, #tpu.memory_space<vmem>>, %arg5: memref<128x128xf32, #tpu.memory_space<vmem>>) attributes {dimension_semantics = [#tpu.dimension_semantics<parallel>], iteration_bounds = array<i64: 2>, scalar_prefetch = 0 : i64, scratch_operands = 0 : i64, tpu.core_type = #tpu.core_type<tc>, window_params = [{transform_indices = @transform_0, window_bounds = array<i64: 128, 64>}, {pipeline_mode = #tpu.pipeline_mode<synchronous>, transform_indices = @transform_1, window_bounds = array<i64: 64, 128>}, {pipeline_mode = #tpu.pipeline_mode<synchronous>, transform_indices = @transform_2, window_bounds = array<i64: 1, 128>}, {pipeline_mode = #tpu.pipeline_mode<synchronous>, transform_indices = @transform_3, window_bounds = array<i64: 1, 128>}, {transform_indices = @transform_4, window_bounds = array<i64: 128, 128>}]} {
    %c0 = arith.constant 0 : index
    %c0_0 = arith.constant 0 : index
    %0 = vector.load %arg1[%c0, %c0_0] : memref<128x64xbf16, #tpu.memory_space<vmem>>, vector<128x64xbf16>
    %c0_1 = arith.constant 0 : index
    %c0_2 = arith.constant 0 : index
    %1 = vector.load %arg2[%c0_1, %c0_2] : memref<64x128xbf16, #tpu.memory_space<vmem>>, vector<64x128xbf16>
    %cst = arith.constant dense<0.000000e+00> : vector<128x128xf32>
    %2 = tpu.matmul %0, %1, %cst {dimension_numbers = #tpu.dot_dimension_numbers<[1], [0], [0], [1], [0, 0, 1, 1], [], []>} : vector<128x64xbf16>, vector<64x128xbf16>, vector<128x128xf32> -> vector<128x128xf32>
    %c0_3 = arith.constant 0 : index
    %c0_4 = arith.constant 0 : index
    %3 = vector.load %arg3[%c0_3, %c0_4] : memref<1x128xf32, #tpu.memory_space<vmem>>, vector<1x128xf32>
    %4 = vector.broadcast %3 : vector<1x128xf32> to vector<128x128xf32>
    %5 = arith.mulf %2, %4 : vector<128x128xf32>
    %c0_5 = arith.constant 0 : index
    %c0_6 = arith.constant 0 : index
    %6 = vector.load %arg4[%c0_5, %c0_6] : memref<1x128xf32, #tpu.memory_space<vmem>>, vector<1x128xf32>
    %7 = vector.broadcast %6 : vector<1x128xf32> to vector<128x128xf32>
    %8 = arith.addf %5, %7 : vector<128x128xf32>
    %cst_7 = arith.constant 0.000000e+00 : f32
    %9 = vector.broadcast %cst_7 : f32 to vector<128x128xf32>
    %10 = arith.cmpf ogt, %8, %9 : vector<128x128xf32>
    %cst_8 = arith.constant 2.000000e-01 : f32
    %11 = vector.broadcast %cst_8 : f32 to vector<128x128xf32>
    %12 = arith.mulf %11, %8 : vector<128x128xf32>
    %13 = arith.select %10, %8, %12 : vector<128x128xi1>, vector<128x128xf32>
    %c0_9 = arith.constant 0 : index
    %c0_10 = arith.constant 0 : index
    %14 = vector.load %arg5[%c0_9, %c0_10] : memref<128x128xf32, #tpu.memory_space<vmem>>, vector<128x128xf32>
    tpu.vector_store %arg5[%c0_9, %c0_10], %13 {strides = array<i32>} : memref<128x128xf32, #tpu.memory_space<vmem>>, vector<128x128xf32>,
    return
  }
  func.func @transform_0(%arg0: i32) -> (i32, i32) {
    %c0_i32 = arith.constant 0 : i32
    %c0_i32_0 = arith.constant 0 : i32
    return %arg0, %c0_i32 : i32, i32
  }
  func.func @transform_1(%arg0: i32) -> (i32, i32) {
    %c0_i32 = arith.constant 0 : i32
    %c0_i32_0 = arith.constant 0 : i32
    %c0_i32_1 = arith.constant 0 : i32
    return %c0_i32, %c0_i32_0 : i32, i32
  }
  func.func @transform_2(%arg0: i32) -> (i32, i32) {
    %c0_i32 = arith.constant 0 : i32
    %c0_i32_0 = arith.constant 0 : i32
    %c0_i32_1 = arith.constant 0 : i32
    return %c0_i32, %c0_i32_0 : i32, i32
  }
  func.func @transform_3(%arg0: i32) -> (i32, i32) {
    %c0_i32 = arith.constant 0 : i32
    %c0_i32_0 = arith.constant 0 : i32
    %c0_i32_1 = arith.constant 0 : i32
    return %c0_i32, %c0_i32_0 : i32, i32
  }
  func.func @transform_4(%arg0: i32) -> (i32, i32) {
    %c0_i32 = arith.constant 0 : i32
    %c0_i32_0 = arith.constant 0 : i32
    return %arg0, %c0_i32 : i32, i32
  }
}

</mosaic_0001>

<llo_original>
// kernel: conv2d_block.3
$region0: #{conv2d_block.3}
  #allocation0 [shape = 'u32[]', space=smem, size = 0x4, offset = 0x4, fixed_abs, tag = 'smem constant byte address 0x4 - core index']
  #allocation1 [shape = 'u32[144,128]{1,0:T(1,128)}', space=vmem, size = 0x12000, scoped, tag = 'internal scratch']
  %s0 = inlined_call_operand.vmem [shape: bf16[256,64], index: 0, kind: input, shape index: {}]
  %s1 = inlined_call_operand.vmem [shape: bf16[64,128], index: 1, kind: input, shape index: {}]
  %s2 = inlined_call_operand.vmem [shape: f32[1,128], index: 2, kind: input, shape index: {}]
  %s3 = inlined_call_operand.vmem [shape: f32[1,128], index: 3, kind: input, shape index: {}]
  %s4 = inlined_call_operand.vmem [shape: f32[256,128], index: 4, kind: output, shape index: {}]
  %s5 = sld [smem:[#allocation0]]
  $region49: #{conv2d_block.3} parent=0
    _
  %s7 = ssub.s32 1, %s5
  %s8 = scalar_select 0, %s7, %s5
  loop: start=0, step=1, limit=4
  $region2: #{conv2d_block.3} parent=0 // loop_pre_header
    _
  $region3: #{conv2d_block.3} parent=0 // loop_header
    %s10 = sphi 0, %s14
    %p11 = scmp.ge.s32.totalorder %s10, 4
    %s20 = sphi 0, %s22
    %s23 = sphi 0, %s20
    %s24 = sphi 0, %s23
    %s40 = sphi 0, %s24
    %s44 = sphi 0, %s44
    %s46 = sphi 0, %s44
    %s47 = sphi 0, %s46
    %s61 = sphi 0, %s47
    %s65 = sphi 0, %s65
    %s67 = sphi 0, %s65
    %s68 = sphi 0, %s67
    %s82 = sphi 0, %s68
    %s86 = sphi 0, %s86
    %s88 = sphi 0, %s86
    %s89 = sphi 0, %s88
    %s103 = sphi 0, %s89
    %s109 = sphi 0, %s111
    %s112 = sphi 0, %s109
    %s113 = sphi 0, %s112
    %s129 = sphi 0, %s113
  $region4: #{conv2d_block.3} parent=0 // loop_header_branch
    %13 = sbr.rel (%p11) target = $region8
  $region5: #{conv2d_block.3} parent=0 // loop_body
    %s15 = ssub.s32 %s10, 1
    %s16 = ssub.s32 %s10, 2
    %s17 = sadd.s32 %s10, 1
    %s18 = ssub.s32 %s10, %s17
    %p19 = scmp.eq.s32.totalorder %s18, 0
    %s21 = sadd.s32 %s20, 1
    %s22 = scalar_select %p19, %s20, %s21
    %p25 = pneg %p19
    %p26 = scmp.eq.s32.totalorder %s10, 1
    %p27 = por %p25, %p26
    %p28 = scmp.ne.s32.totalorder %s20, %s23
    %p29 = scmp.eq.s32.totalorder %s10, 0
    %p30 = por %p28, %p29
    %p31 = scmp.ne.s32.totalorder %s20, %s23
    %p32 = scmp.eq.s32.totalorder %s15, 1
    %p33 = por %p31, %p32
    %p34 = scmp.ne.s32.totalorder %s23, %s24
    %p35 = scmp.eq.s32.totalorder %s15, 0
    %p36 = por %p34, %p35
    %p37 = scmp.ne.s32.totalorder %s23, %s24
    %p38 = scmp.eq.s32.totalorder %s16, 1
    %p39 = por %p37, %p38
    %p41 = scmp.ne.s32.totalorder %s24, %s40
    %p42 = scmp.eq.s32.totalorder %s16, 0
    %p43 = por %p41, %p42
    %s45 = sadd.s32 %s44, 1
    %p48 = scmp.eq.s32.totalorder %s10, 1
    %p49 = scmp.ne.s32.totalorder %s44, %s46
    %p50 = scmp.eq.s32.totalorder %s10, 0
    %p51 = por %p49, %p50
    %p52 = scmp.ne.s32.totalorder %s44, %s46
    %p53 = scmp.eq.s32.totalorder %s15, 1
    %p54 = por %p52, %p53
    %p55 = scmp.ne.s32.totalorder %s46, %s47
    %p56 = scmp.eq.s32.totalorder %s15, 0
    %p57 = por %p55, %p56
    %p58 = scmp.ne.s32.totalorder %s46, %s47
    %p59 = scmp.eq.s32.totalorder %s16, 1
    %p60 = por %p58, %p59
    %p62 = scmp.ne.s32.totalorder %s47, %s61
    %p63 = scmp.eq.s32.totalorder %s16, 0
    %p64 = por %p62, %p63
    %s66 = sadd.s32 %s65, 1
    %p69 = scmp.eq.s32.totalorder %s10, 1
    %p70 = scmp.ne.s32.totalorder %s65, %s67
    %p71 = scmp.eq.s32.totalorder %s10, 0
    %p72 = por %p70, %p71
    %p73 = scmp.ne.s32.totalorder %s65, %s67
    %p74 = scmp.eq.s32.totalorder %s15, 1
    %p75 = por %p73, %p74
    %p76 = scmp.ne.s32.totalorder %s67, %s68
    %p77 = scmp.eq.s32.totalorder %s15, 0
    %p78 = por %p76, %p77
    %p79 = scmp.ne.s32.totalorder %s67, %s68
    %p80 = scmp.eq.s32.totalorder %s16, 1
    %p81 = por %p79, %p80
    %p83 = scmp.ne.s32.totalorder %s68, %s82
    %p84 = scmp.eq.s32.totalorder %s16, 0
    %p85 = por %p83, %p84
    %s87 = sadd.s32 %s86, 1
    %p90 = scmp.eq.s32.totalorder %s10, 1
    %p91 = scmp.ne.s32.totalorder %s86, %s88
    %p92 = scmp.eq.s32.totalorder %s10, 0
    %p93 = por %p91, %p92
    %p94 = scmp.ne.s32.totalorder %s86, %s88
    %p95 = scmp.eq.s32.totalorder %s15, 1
    %p96 = por %p94, %p95
    %p97 = scmp.ne.s32.totalorder %s88, %s89
    %p98 = scmp.eq.s32.totalorder %s15, 0
    %p99 = por %p97, %p98
    %p100 = scmp.ne.s32.totalorder %s88, %s89
    %p101 = scmp.eq.s32.totalorder %s16, 1
    %p102 = por %p100, %p101
    %p104 = scmp.ne.s32.totalorder %s89, %s103
    %p105 = scmp.eq.s32.totalorder %s16, 0
    %p106 = por %p104, %p105
    %s107 = ssub.s32 %s10, %s17
    %p108 = scmp.eq.s32.totalorder %s107, 0
    %s110 = sadd.s32 %s109, 1
    %s111 = scalar_select %p108, %s109, %s110
    %p114 = pneg %p108
    %p115 = scmp.eq.s32.totalorder %s10, 1
    %p116 = por %p114, %p115
    %p117 = scmp.ne.s32.totalorder %s109, %s112
    %p118 = scmp.eq.s32.totalorder %s10, 0
    %p119 = por %p117, %p118
    %p120 = scmp.ne.s32.totalorder %s109, %s112
    %p121 = scmp.eq.s32.totalorder %s15, 1
    %p122 = por %p120, %p121
    %p123 = scmp.ne.s32.totalorder %s112, %s113
    %p124 = scmp.eq.s32.totalorder %s15, 0
    %p125 = por %p123, %p124
    %p126 = scmp.ne.s32.totalorder %s112, %s113
    %p127 = scmp.eq.s32.totalorder %s16, 1
    %p128 = por %p126, %p127
    %p130 = scmp.ne.s32.totalorder %s113, %s129
    %p131 = scmp.eq.s32.totalorder %s16, 0
    %p132 = por %p130, %p131
    %p133 = scmp.le.s32.totalorder 1, %s10
    %p134 = scmp.lt.s32.totalorder %s10, 3
    %p135 = pnand %p133, %p134
    %p136 = pneg %p135
    // Predicated region
    $region9: #{conv2d_block.3} parent=5 // pred_check
      _
    $region10: #{conv2d_block.3} parent=5 // pred_check_branch
      %138 = sbr.rel (%p135) target = $region12
    $region11: #{conv2d_block.3} parent=5 // pred_region
      %s139 = ssub.s32 %s10, 1
      // Predicated region
      $region13: #{conv2d_block.3} parent=11 // pred_check
        %p140 = pneg %p57
      $region14: #{conv2d_block.3} parent=11 // pred_check_branch
        %142 = sbr.rel (%p140) target = $region16
      $region15: #{conv2d_block.3} parent=11 // pred_region
        _
      $region16: #{conv2d_block.3} parent=11 // pred_fallthru
        _
      // Predicated region
      $region17: #{conv2d_block.3} parent=11 // pred_check
        %p143 = pneg %p78
      $region18: #{conv2d_block.3} parent=11 // pred_check_branch
        %145 = sbr.rel (%p143) target = $region20
      $region19: #{conv2d_block.3} parent=11 // pred_region
        _
      $region20: #{conv2d_block.3} parent=11 // pred_fallthru
        _
      // Predicated region
      $region21: #{conv2d_block.3} parent=11 // pred_check
        %p146 = pneg %p99
      $region22: #{conv2d_block.3} parent=11 // pred_check_branch
        %148 = sbr.rel (%p146) target = $region24
      $region23: #{conv2d_block.3} parent=11 // pred_region
        _
      $region24: #{conv2d_block.3} parent=11 // pred_fallthru
        _
    $region12: #{conv2d_block.3} parent=5 // pred_fallthru
      _
    %p149 = scmp.lt.s32.totalorder %s10, 2
    // Predicated region
    $region25: #{conv2d_block.3} parent=5 // pred_check
      %p150 = pneg %p149
    $region26: #{conv2d_block.3} parent=5 // pred_check_branch
      %152 = sbr.rel (%p150) target = $region28
    $region27: #{conv2d_block.3} parent=5 // pred_region
      // Predicated region
      $region29: #{conv2d_block.3} parent=27 // pred_check
        %p153 = pneg %p30
      $region30: #{conv2d_block.3} parent=27 // pred_check_branch
        %155 = sbr.rel (%p153) target = $region32
      $region31: #{conv2d_block.3} parent=27 // pred_region
        %s156 = smul.u32 16, %s10
        %p157 = scmp.lt.s32.totalorder %s156, 31
        %s158 = scalar_select %p157, %s156, 31
        %s159 = smul.addr %s158, 4
        %s160 = scalar_lea.vmem %s0, %s159
        %s161 = smul.u32 16, %s10
      $region32: #{conv2d_block.3} parent=27 // pred_fallthru
        _
    $region28: #{conv2d_block.3} parent=5 // pred_fallthru
      _
    %p162 = scmp.le.s32.totalorder 1, %s10
    %p163 = scmp.lt.s32.totalorder %s10, 3
    %p164 = pnand %p162, %p163
    %p165 = pneg %p164
    // Predicated region
    $region33: #{conv2d_block.3} parent=5 // pred_check
      _
    $region34: #{conv2d_block.3} parent=5 // pred_check_branch
      %167 = sbr.rel (%p164) target = $region36
    $region35: #{conv2d_block.3} parent=5 // pred_region
      %s168 = ssub.s32 %s10, 1
      %s169 = smul.u32 16, %s15
      %p170 = scmp.lt.s32.totalorder %s169, 31
      %s171 = scalar_select %p170, %s169, 31
      %s172 = smul.addr %s171, 4
      %s173 = scalar_lea.vmem %s0, %s172
      %p174 = pneg %p36
      %p175 = pneg %p33
      %p176 = pneg %p57
      %p177 = pneg %p54
      %p178 = pneg %p78
      %p179 = pneg %p75
      %p180 = pneg %p99
      %p181 = pneg %p96
      %p182 = pneg %p125
      %p183 = pneg %p122
      %s184 = smul.u32 16, %s15
      %p185 = scmp.lt.s32.totalorder %s184, 31
      %s186 = scalar_select %p185, %s184, 31
      %s187 = smul.addr %s186, 8
      %s188 = scalar_lea.vmem %s4, %s187
      %s189 = smul.u32 16, %s15
      %p190 = scmp.lt.s32.totalorder %s189, 31
      %s191 = scalar_select %p190, %s189, 31
      %s192 = smul.addr %s191, 4
      %s193 = scalar_lea.vmem %s0, %s192
      %s194 = smul.u32 16, %s15
      %s195 = smul.u32 16, %s15
      %p196 = scmp.lt.s32.totalorder %s195, 31
      %s197 = scalar_select %p196, %s195, 31
      %s198 = smul.addr %s197, 8
      %s199 = scalar_lea.vmem %s4, %s198
      %s200 = smul.u32 16, %s15
      %v202 = vld [vmem:[%s193] sm:$0xf]
      %v203 = vld [vmem:[%s193 + $0x4] sm:$0xf]
      %v204 = vld [vmem:[%s193 + $0x8] sm:$0xf]
      %v205 = vld [vmem:[%s193 + $0xc] sm:$0xf]
      %v206 = vld [vmem:[%s193 + $0x10] sm:$0xf]
      %v207 = vld [vmem:[%s193 + $0x14] sm:$0xf]
      %v208 = vld [vmem:[%s193 + $0x18] sm:$0xf]
      %v209 = vld [vmem:[%s193 + $0x1c] sm:$0xf]
      %v210 = vld [vmem:[%s193 + $0x20] sm:$0xf]
      %v211 = vld [vmem:[%s193 + $0x24] sm:$0xf]
      %v212 = vld [vmem:[%s193 + $0x28] sm:$0xf]
      %v213 = vld [vmem:[%s193 + $0x2c] sm:$0xf]
      %v214 = vld [vmem:[%s193 + $0x30] sm:$0xf]
      %v215 = vld [vmem:[%s193 + $0x34] sm:$0xf]
      %v216 = vld [vmem:[%s193 + $0x38] sm:$0xf]
      %v217 = vld [vmem:[%s193 + $0x3c] sm:$0xf]
      %v218 = vld [vmem:[%s1] sm:$0xf]
      %v219 = vld [vmem:[%s1 + $0x4] sm:$0xf]
      %v220 = vld [vmem:[%s1 + $0x8] sm:$0xf]
      %v221 = vld [vmem:[%s1 + $0xc] sm:$0xf]
      %v222 = vld [vmem:[%s1 + $0x10] sm:$0xf]
      %v223 = vld [vmem:[%s1 + $0x14] sm:$0xf]
      %v224 = vld [vmem:[%s1 + $0x18] sm:$0xf]
      %v225 = vld [vmem:[%s1 + $0x1c] sm:$0xf]
      %v242 = vunpack.c.l.b16 %v202
      %v243 = vunpack.c.l.b16 %v203
      %v244 = vunpack.c.l.b16 %v204
      %v245 = vunpack.c.l.b16 %v205
      %v246 = vunpack.c.l.b16 %v206
      %v247 = vunpack.c.l.b16 %v207
      %v248 = vunpack.c.l.b16 %v208
      %v249 = vunpack.c.l.b16 %v209
      %v250 = vunpack.c.l.b16 %v210
      %v251 = vunpack.c.l.b16 %v211
      %v252 = vunpack.c.l.b16 %v212
      %v253 = vunpack.c.l.b16 %v213
      %v254 = vunpack.c.l.b16 %v214
      %v255 = vunpack.c.l.b16 %v215
      %v256 = vunpack.c.l.b16 %v216
      %v257 = vunpack.c.l.b16 %v217
      %v258 = vpack.c.b16 %v243, %v242
      %v259 = vpack.c.b16 %v245, %v244
      %v260 = vpack.c.b16 %v247, %v246
      %v261 = vpack.c.b16 %v249, %v248
      %v262 = vpack.c.b16 %v251, %v250
      %v263 = vpack.c.b16 %v253, %v252
      %v264 = vpack.c.b16 %v255, %v254
      %v265 = vpack.c.b16 %v257, %v256
      %v274 = vunpack.c.l.b16 %v218
      %v275 = vunpack.c.l.b16 %v219
      %v276 = vunpack.c.l.b16 %v220
      %v277 = vunpack.c.l.b16 %v221
      %v278 = vunpack.c.l.b16 %v222
      %v279 = vunpack.c.l.b16 %v223
      %v280 = vunpack.c.l.b16 %v224
      %v281 = vunpack.c.l.b16 %v225
      %v282 = vpack.c.b16 %v275, %v274
      %v283 = vpack.c.b16 %v277, %v276
      %v284 = vpack.c.b16 %v279, %v278
      %v285 = vpack.c.b16 %v281, %v280
      %vm290 = vcmask 523264
      %v292 = vsel %vm290, %v258, 0
      %v295 = vsel %vm290, %v259, 0
      %v298 = vsel %vm290, %v260, 0
      %v301 = vsel %vm290, %v261, 0
      %v304 = vsel %vm290, %v262, 0
      %v307 = vsel %vm290, %v263, 0
      %v310 = vsel %vm290, %v264, 0
      %v313 = vsel %vm290, %v265, 0
      %315 = vmatprep.subr.bf16.mxu0 0
      %316 = vmatpush1.bf16.msra.mxu0 %v282
      %317 = vmatprep.subr.bf16.mxu0 0
      %318 = vmatpush1.bf16.msra.mxu0 %v283
      %319 = vmatprep.subr.bf16.mxu0 0
      %320 = vmatpush1.bf16.msra.mxu0 %v284
      %321 = vmatprep.subr.bf16.mxu0 0
      %322 = vmatpush1.bf16.msra.mxu0 %v285
      %323 = vmatprep.subr.bf16.mxu0 0
      %324 = vmatpush1.bf16.msra.mxu0 0
      %325 = vmatprep.subr.bf16.mxu0 0
      %326 = vmatpush1.bf16.msra.mxu0 0
      %327 = vmatprep.subr.bf16.mxu0 0
      %328 = vmatpush1.bf16.msra.mxu0 0
      %329 = vmatprep.subr.bf16.mxu0 0
      %330 = vmatpush1.bf16.msra.mxu0 0
      %331 = vmatprep.subr.bf16.mxu0 0
      %332 = vmatpush1.bf16.msra.mxu0 0
      %333 = vmatprep.subr.bf16.mxu0 0
      %334 = vmatpush1.bf16.msra.mxu0 0
      %335 = vmatprep.subr.bf16.mxu0 0
      %336 = vmatpush1.bf16.msra.mxu0 0
      %337 = vmatprep.subr.bf16.mxu0 0
      %338 = vmatpush1.bf16.msra.mxu0 0
      %339 = vmatprep.subr.bf16.mxu0 0
      %340 = vmatpush1.bf16.msra.mxu0 0
      %341 = vmatprep.subr.bf16.mxu0 0
      %342 = vmatpush1.bf16.msra.mxu0 0
      %343 = vmatprep.subr.bf16.mxu0 0
      %344 = vmatpush1.bf16.msra.mxu0 0
      %345 = vmatprep.subr.bf16.mxu0 0
      %346 = vmatpush1.bf16.msra.mxu0 0
      %347 = vmatprep.mubr.bf16.mxu0 0
      %348 = vmatmul.mubr.bf16.gmra.mrb[0].mxu0 %v292
      %v349 = vpop.f32.mrb[0].mxu0
      %v350 = vadd.f32 0.0, %v349
      %v351 = vpop.f32.mrb[0].mxu0
      %v352 = vpop.f32.mrb[0].mxu0
      %v353 = vadd.f32 0.0, %v352
      %v354 = vpop.f32.mrb[0].mxu0
      %355 = vmatprep.mubr.bf16.mxu0 0
      %356 = vmatmul.mubr.bf16.gmra.mrb[0].mxu0 %v295
      %v357 = vpop.f32.mrb[0].mxu0
      %v358 = vadd.f32 0.0, %v357
      %v359 = vpop.f32.mrb[0].mxu0
      %v360 = vpop.f32.mrb[0].mxu0
      %v361 = vadd.f32 0.0, %v360
      %v362 = vpop.f32.mrb[0].mxu0
      %363 = vmatprep.mubr.bf16.mxu0 0
      %364 = vmatmul.mubr.bf16.gmra.mrb[0].mxu0 %v298
      %v365 = vpop.f32.mrb[0].mxu0
      %v366 = vadd.f32 0.0, %v365
      %v367 = vpop.f32.mrb[0].mxu0
      %v368 = vpop.f32.mrb[0].mxu0
      %v369 = vadd.f32 0.0, %v368
      %v370 = vpop.f32.mrb[0].mxu0
      %371 = vmatprep.mubr.bf16.mxu0 0
      %372 = vmatmul.mubr.bf16.gmra.mrb[0].mxu0 %v301
      %v373 = vpop.f32.mrb[0].mxu0
      %v374 = vadd.f32 0.0, %v373
      %v375 = vpop.f32.mrb[0].mxu0
      %v376 = vpop.f32.mrb[0].mxu0
      %v377 = vadd.f32 0.0, %v376
      %v378 = vpop.f32.mrb[0].mxu0
      %379 = vmatprep.mubr.bf16.mxu0 0
      %380 = vmatmul.mubr.bf16.gmra.mrb[0].mxu0 %v304
      %v381 = vpop.f32.mrb[0].mxu0
      %v382 = vadd.f32 0.0, %v381
      %v383 = vpop.f32.mrb[0].mxu0
      %v384 = vpop.f32.mrb[0].mxu0
      %v385 = vadd.f32 0.0, %v384
      %v386 = vpop.f32.mrb[0].mxu0
      %387 = vmatprep.mubr.bf16.mxu0 0
      %388 = vmatmul.mubr.bf16.gmra.mrb[0].mxu0 %v307
      %v389 = vpop.f32.mrb[0].mxu0
      %v390 = vadd.f32 0.0, %v389
      %v391 = vpop.f32.mrb[0].mxu0
      %v392 = vpop.f32.mrb[0].mxu0
      %v393 = vadd.f32 0.0, %v392
      %v394 = vpop.f32.mrb[0].mxu0
      %395 = vmatprep.mubr.bf16.mxu0 0
      %396 = vmatmul.mubr.bf16.gmra.mrb[0].mxu0 %v310
      %v397 = vpop.f32.mrb[0].mxu0
      %v398 = vadd.f32 0.0, %v397
      %v399 = vpop.f32.mrb[0].mxu0
      %v400 = vpop.f32.mrb[0].mxu0
      %v401 = vadd.f32 0.0, %v400
      %v402 = vpop.f32.mrb[0].mxu0
      %403 = vmatprep.mubr.bf16.mxu0 0
      %404 = vmatmul.mubr.bf16.gmra.mrb[0].mxu0 %v313
      %v405 = vpop.f32.mrb[0].mxu0
      %v406 = vadd.f32 0.0, %v405
      %v407 = vpop.f32.mrb[0].mxu0
      %v408 = vpop.f32.mrb[0].mxu0
      %v409 = vadd.f32 0.0, %v408
      %v410 = vpop.f32.mrb[0].mxu0
      %411 = vdwg.mxu0
      %v412 = vld [vmem:[%s2] sm:$0x1]
      %v414 = vlaneseq
      %v415 = vshrl.u32 %v414, 7
      %v416 = vsub.s32 0, %v415
      %v417 = vrot.slane %v412, %v416
      %v419 = vmul.f32 %v350, %v417
      %v420 = vmul.f32 %v353, %v417
      %v421 = vmul.f32 %v358, %v417
      %v422 = vmul.f32 %v361, %v417
      %v423 = vmul.f32 %v366, %v417
      %v424 = vmul.f32 %v369, %v417
      %v425 = vmul.f32 %v374, %v417
      %v426 = vmul.f32 %v377, %v417
      %v427 = vmul.f32 %v382, %v417
      %v428 = vmul.f32 %v385, %v417
      %v429 = vmul.f32 %v390, %v417
      %v430 = vmul.f32 %v393, %v417
      %v431 = vmul.f32 %v398, %v417
      %v432 = vmul.f32 %v401, %v417
      %v433 = vmul.f32 %v406, %v417
      %v434 = vmul.f32 %v409, %v417
      %v435 = vld [vmem:[%s3] sm:$0x1]
      %v437 = vlaneseq
      %v438 = vshrl.u32 %v437, 7
      %v439 = vsub.s32 0, %v438
      %v440 = vrot.slane %v435, %v439
      %v442 = vadd.f32 %v419, %v440
      %v443 = vadd.f32 %v420, %v440
      %v444 = vadd.f32 %v421, %v440
      %v445 = vadd.f32 %v422, %v440
      %v446 = vadd.f32 %v423, %v440
      %v447 = vadd.f32 %v424, %v440
      %v448 = vadd.f32 %v425, %v440
      %v449 = vadd.f32 %v426, %v440
      %v450 = vadd.f32 %v427, %v440
      %v451 = vadd.f32 %v428, %v440
      %v452 = vadd.f32 %v429, %v440
      %v453 = vadd.f32 %v430, %v440
      %v454 = vadd.f32 %v431, %v440
      %v455 = vadd.f32 %v432, %v440
      %v456 = vadd.f32 %v433, %v440
      %v457 = vadd.f32 %v434, %v440
      %vm458 = vcmp.gt.f32.partialorder %v442, 0.0
      %vm459 = vcmp.gt.f32.partialorder %v443, 0.0
      %vm460 = vcmp.gt.f32.partialorder %v444, 0.0
      %vm461 = vcmp.gt.f32.partialorder %v445, 0.0
      %vm462 = vcmp.gt.f32.partialorder %v446, 0.0
      %vm463 = vcmp.gt.f32.partialorder %v447, 0.0
      %vm464 = vcmp.gt.f32.partialorder %v448, 0.0
      %vm465 = vcmp.gt.f32.partialorder %v449, 0.0
      %vm466 = vcmp.gt.f32.partialorder %v450, 0.0
      %vm467 = vcmp.gt.f32.partialorder %v451, 0.0
      %vm468 = vcmp.gt.f32.partialorder %v452, 0.0
      %vm469 = vcmp.gt.f32.partialorder %v453, 0.0
      %vm470 = vcmp.gt.f32.partialorder %v454, 0.0
      %vm471 = vcmp.gt.f32.partialorder %v455, 0.0
      %vm472 = vcmp.gt.f32.partialorder %v456, 0.0
      %vm473 = vcmp.gt.f32.partialorder %v457, 0.0
      %v474 = vmul.f32 %v442, 0.2
      %v475 = vmul.f32 %v443, 0.2
      %v476 = vmul.f32 %v444, 0.2
      %v477 = vmul.f32 %v445, 0.2
      %v478 = vmul.f32 %v446, 0.2
      %v479 = vmul.f32 %v447, 0.2
      %v480 = vmul.f32 %v448, 0.2
      %v481 = vmul.f32 %v449, 0.2
      %v482 = vmul.f32 %v450, 0.2
      %v483 = vmul.f32 %v451, 0.2
      %v484 = vmul.f32 %v452, 0.2
      %v485 = vmul.f32 %v453, 0.2
      %v486 = vmul.f32 %v454, 0.2
      %v487 = vmul.f32 %v455, 0.2
      %v488 = vmul.f32 %v456, 0.2
      %v489 = vmul.f32 %v457, 0.2
      %v490 = vsel %vm458, %v442, %v474
      %v491 = vsel %vm459, %v443, %v475
      %v492 = vsel %vm460, %v444, %v476
      %v493 = vsel %vm461, %v445, %v477
      %v494 = vsel %vm462, %v446, %v478
      %v495 = vsel %vm463, %v447, %v479
      %v496 = vsel %vm464, %v448, %v480
      %v497 = vsel %vm465, %v449, %v481
      %v498 = vsel %vm466, %v450, %v482
      %v499 = vsel %vm467, %v451, %v483
      %v500 = vsel %vm468, %v452, %v484
      %v501 = vsel %vm469, %v453, %v485
      %v502 = vsel %vm470, %v454, %v486
      %v503 = vsel %vm471, %v455, %v487
      %v504 = vsel %vm472, %v456, %v488
      %v505 = vsel %vm473, %v457, %v489
      %506 = vst [vmem:[%s199] sm:$0xff] %v490
      %507 = vst [vmem:[%s199 + $0x8] sm:$0xff] %v491
      %508 = vst [vmem:[%s199 + $0x10] sm:$0xff] %v492
      %509 = vst [vmem:[%s199 + $0x18] sm:$0xff] %v493
      %510 = vst [vmem:[%s199 + $0x20] sm:$0xff] %v494
      %511 = vst [vmem:[%s199 + $0x28] sm:$0xff] %v495
      %512 = vst [vmem:[%s199 + $0x30] sm:$0xff] %v496
      %513 = vst [vmem:[%s199 + $0x38] sm:$0xff] %v497
      %514 = vst [vmem:[%s199 + $0x40] sm:$0xff] %v498
      %515 = vst [vmem:[%s199 + $0x48] sm:$0xff] %v499
      %516 = vst [vmem:[%s199 + $0x50] sm:$0xff] %v500
      %517 = vst [vmem:[%s199 + $0x58] sm:$0xff] %v501
      %518 = vst [vmem:[%s199 + $0x60] sm:$0xff] %v502
      %519 = vst [vmem:[%s199 + $0x68] sm:$0xff] %v503
      %520 = vst [vmem:[%s199 + $0x70] sm:$0xff] %v504
      %521 = vst [vmem:[%s199 + $0x78] sm:$0xff] %v505
      %s522 = smul.u32 16, %s15
      %p523 = scmp.lt.s32.totalorder %s522, 31
      %s524 = scalar_select %p523, %s522, 31
      %s525 = smul.addr %s524, 8
      %s526 = scalar_lea.vmem %s4, %s525
      // Predicated region
      $region37: #{conv2d_block.3} parent=35 // pred_check
        %p527 = pneg %p122
      $region38: #{conv2d_block.3} parent=35 // pred_check_branch
        %529 = sbr.rel (%p527) target = $region40
      $region39: #{conv2d_block.3} parent=35 // pred_region
        %s530 = smul.u32 16, %s15
      $region40: #{conv2d_block.3} parent=35 // pred_fallthru
        _
    $region36: #{conv2d_block.3} parent=5 // pred_fallthru
      _
    %p531 = scmp.le.s32.totalorder 2, %s10
    // Predicated region
    $region41: #{conv2d_block.3} parent=5 // pred_check
      %p532 = pneg %p531
    $region42: #{conv2d_block.3} parent=5 // pred_check_branch
      %534 = sbr.rel (%p532) target = $region44
    $region43: #{conv2d_block.3} parent=5 // pred_region
      %s535 = ssub.s32 %s10, 2
      // Predicated region
      $region45: #{conv2d_block.3} parent=43 // pred_check
        %p536 = pneg %p128
      $region46: #{conv2d_block.3} parent=43 // pred_check_branch
        %538 = sbr.rel (%p536) target = $region48
      $region47: #{conv2d_block.3} parent=43 // pred_region
        %s539 = smul.u32 16, %s16
        %p540 = scmp.lt.s32.totalorder %s539, 31
        %s541 = scalar_select %p540, %s539, 31
        %s542 = smul.addr %s541, 8
        %s543 = scalar_lea.vmem %s4, %s542
      $region48: #{conv2d_block.3} parent=43 // pred_fallthru
        _
    $region44: #{conv2d_block.3} parent=5 // pred_fallthru
      _
  $region6: #{conv2d_block.3} parent=0 // loop_footer
    %s14 = sadd.s32 1, %s10
  $region7: #{conv2d_block.3} parent=0 // loop_footer_branch
    %9 = sbr.rel target = $region3
  $region8: #{conv2d_block.3} parent=0 // loop_exit
    _

// kernel: conv2d_block.2
$region0: #{conv2d_block.2}
  #allocation0 [shape = 'u32[]', space=smem, size = 0x4, offset = 0x4, fixed_abs, tag = 'smem constant byte address 0x4 - core index']
  #allocation1 [shape = 'u32[144,128]{1,0:T(1,128)}', space=vmem, size = 0x12000, scoped, tag = 'internal scratch']
  %s0 = inlined_call_operand.vmem [shape: bf16[256,64], index: 0, kind: input, shape index: {}]
  %s1 = inlined_call_operand.vmem [shape: bf16[64,128], index: 1, kind: input, shape index: {}]
  %s2 = inlined_call_operand.vmem [shape: f32[16,128], index: 2, kind: output, shape index: {}]
  %s3 = sld [smem:[#allocation0]]
  $region45: #{conv2d_block.2} parent=0
    _
  %s5 = ssub.s32 1, %s3
  %s6 = scalar_select 0, %s5, %s3
  loop: start=0, step=1, limit=4
  $region2: #{conv2d_block.2} parent=0 // loop_pre_header
    _
  $region3: #{conv2d_block.2} parent=0 // loop_header
    %s8 = sphi 0, %s12
    %p9 = scmp.ge.s32.totalorder %s8, 4
    %s15 = sphi 0, %s27
    %s16 = sphi 0, %s23
    %s17 = sphi 0, %s15
    %s18 = sphi 0, %s16
    %s19 = sphi 0, %s17
    %s20 = sphi 0, %s18
    %s32 = sphi 0, %s34
    %s35 = sphi 0, %s32
    %s36 = sphi 0, %s35
    %s52 = sphi 0, %s36
    %s56 = sphi 0, %s56
    %s58 = sphi 0, %s56
    %s59 = sphi 0, %s58
    %s73 = sphi 0, %s59
    %s79 = sphi 0, %s81
    %s82 = sphi 0, %s79
    %s83 = sphi 0, %s82
    %s99 = sphi 0, %s83
  $region4: #{conv2d_block.2} parent=0 // loop_header_branch
    %11 = sbr.rel (%p9) target = $region8
  $region5: #{conv2d_block.2} parent=0 // loop_body
    %s13 = ssub.s32 %s8, 1
    %s14 = ssub.s32 %s8, 2
    %s21 = sadd.s32 1, %s16
    %p22 = scmp.ge.s32.totalorder %s21, 1
    %s23 = scalar_select %p22, 0, %s21
    %s24 = sadd.s32 1, %s15
    %s25 = scalar_select %p22, %s24, %s15
    %p26 = scmp.ge.s32.totalorder %s25, 2
    %s27 = scalar_select %p26, 0, %s25
    %s28 = sadd.s32 %s15, %s16
    %s29 = sadd.s32 %s27, %s23
    %s30 = ssub.s32 %s28, %s29
    %p31 = scmp.eq.s32.totalorder %s30, 0
    %s33 = sadd.s32 %s32, 1
    %s34 = scalar_select %p31, %s32, %s33
    %p37 = pneg %p31
    %p38 = scmp.eq.s32.totalorder %s8, 1
    %p39 = por %p37, %p38
    %p40 = scmp.ne.s32.totalorder %s32, %s35
    %p41 = scmp.eq.s32.totalorder %s8, 0
    %p42 = por %p40, %p41
    %p43 = scmp.ne.s32.totalorder %s32, %s35
    %p44 = scmp.eq.s32.totalorder %s13, 1
    %p45 = por %p43, %p44
    %p46 = scmp.ne.s32.totalorder %s35, %s36
    %p47 = scmp.eq.s32.totalorder %s13, 0
    %p48 = por %p46, %p47
    %p49 = scmp.ne.s32.totalorder %s35, %s36
    %p50 = scmp.eq.s32.totalorder %s14, 1
    %p51 = por %p49, %p50
    %p53 = scmp.ne.s32.totalorder %s36, %s52
    %p54 = scmp.eq.s32.totalorder %s14, 0
    %p55 = por %p53, %p54
    %s57 = sadd.s32 %s56, 1
    %p60 = scmp.eq.s32.totalorder %s8, 1
    %p61 = scmp.ne.s32.totalorder %s56, %s58
    %p62 = scmp.eq.s32.totalorder %s8, 0
    %p63 = por %p61, %p62
    %p64 = scmp.ne.s32.totalorder %s56, %s58
    %p65 = scmp.eq.s32.totalorder %s13, 1
    %p66 = por %p64, %p65
    %p67 = scmp.ne.s32.totalorder %s58, %s59
    %p68 = scmp.eq.s32.totalorder %s13, 0
    %p69 = por %p67, %p68
    %p70 = scmp.ne.s32.totalorder %s58, %s59
    %p71 = scmp.eq.s32.totalorder %s14, 1
    %p72 = por %p70, %p71
    %p74 = scmp.ne.s32.totalorder %s59, %s73
    %p75 = scmp.eq.s32.totalorder %s14, 0
    %p76 = por %p74, %p75
    %s77 = ssub.s32 %s15, %s27
    %p78 = scmp.eq.s32.totalorder %s77, 0
    %s80 = sadd.s32 %s79, 1
    %s81 = scalar_select %p78, %s79, %s80
    %p84 = pneg %p78
    %p85 = scmp.eq.s32.totalorder %s8, 1
    %p86 = por %p84, %p85
    %p87 = scmp.ne.s32.totalorder %s79, %s82
    %p88 = scmp.eq.s32.totalorder %s8, 0
    %p89 = por %p87, %p88
    %p90 = scmp.ne.s32.totalorder %s79, %s82
    %p91 = scmp.eq.s32.totalorder %s13, 1
    %p92 = por %p90, %p91
    %p93 = scmp.ne.s32.totalorder %s82, %s83
    %p94 = scmp.eq.s32.totalorder %s13, 0
    %p95 = por %p93, %p94
    %p96 = scmp.ne.s32.totalorder %s82, %s83
    %p97 = scmp.eq.s32.totalorder %s14, 1
    %p98 = por %p96, %p97
    %p100 = scmp.ne.s32.totalorder %s83, %s99
    %p101 = scmp.eq.s32.totalorder %s14, 0
    %p102 = por %p100, %p101
    %p103 = scmp.le.s32.totalorder 1, %s8
    %p104 = scmp.lt.s32.totalorder %s8, 3
    %p105 = pnand %p103, %p104
    %p106 = pneg %p105
    // Predicated region
    $region9: #{conv2d_block.2} parent=5 // pred_check
      _
    $region10: #{conv2d_block.2} parent=5 // pred_check_branch
      %108 = sbr.rel (%p105) target = $region12
    $region11: #{conv2d_block.2} parent=5 // pred_region
      %s109 = ssub.s32 %s8, 1
      // Predicated region
      $region13: #{conv2d_block.2} parent=11 // pred_check
        %p110 = pneg %p69
      $region14: #{conv2d_block.2} parent=11 // pred_check_branch
        %112 = sbr.rel (%p110) target = $region16
      $region15: #{conv2d_block.2} parent=11 // pred_region
        _
      $region16: #{conv2d_block.2} parent=11 // pred_fallthru
        _
    $region12: #{conv2d_block.2} parent=5 // pred_fallthru
      _
    %p113 = scmp.lt.s32.totalorder %s8, 2
    // Predicated region
    $region17: #{conv2d_block.2} parent=5 // pred_check
      %p114 = pneg %p113
    $region18: #{conv2d_block.2} parent=5 // pred_check_branch
      %116 = sbr.rel (%p114) target = $region20
    $region19: #{conv2d_block.2} parent=5 // pred_region
      // Predicated region
      $region21: #{conv2d_block.2} parent=19 // pred_check
        %p117 = pneg %p42
      $region22: #{conv2d_block.2} parent=19 // pred_check_branch
        %119 = sbr.rel (%p117) target = $region24
      $region23: #{conv2d_block.2} parent=19 // pred_region
        %s120 = sadd.s32 %s15, %s16
        %s121 = smul.u32 16, %s120
        %p122 = scmp.lt.s32.totalorder %s121, 31
        %s123 = scalar_select %p122, %s121, 31
        %s124 = smul.addr %s123, 4
        %s125 = scalar_lea.vmem %s0, %s124
        %s126 = sadd.s32 %s15, %s16
        %s127 = smul.u32 16, %s126
      $region24: #{conv2d_block.2} parent=19 // pred_fallthru
        _
    $region20: #{conv2d_block.2} parent=5 // pred_fallthru
      _
    %p128 = scmp.le.s32.totalorder 1, %s8
    %p129 = scmp.lt.s32.totalorder %s8, 3
    %p130 = pnand %p128, %p129
    %p131 = pneg %p130
    // Predicated region
    $region25: #{conv2d_block.2} parent=5 // pred_check
      _
    $region26: #{conv2d_block.2} parent=5 // pred_check_branch
      %133 = sbr.rel (%p130) target = $region28
    $region27: #{conv2d_block.2} parent=5 // pred_region
      %s134 = ssub.s32 %s8, 1
      %s135 = sadd.s32 %s17, %s18
      %s136 = smul.u32 16, %s135
      %p137 = scmp.lt.s32.totalorder %s136, 31
      %s138 = scalar_select %p137, %s136, 31
      %s139 = smul.addr %s138, 4
      %s140 = scalar_lea.vmem %s0, %s139
      %p141 = pneg %p48
      %p142 = pneg %p45
      %p143 = pneg %p69
      %p144 = pneg %p66
      %p145 = pneg %p95
      %p146 = pneg %p92
      %p147 = scmp.lt.s32.totalorder %s17, 1
      %s148 = scalar_select %p147, %s17, 1
      %s149 = smul.addr %s148, 8
      %s150 = scalar_lea.vmem %s2, %s149
      %s151 = sadd.s32 %s17, %s18
      %s152 = smul.u32 16, %s151
      %p153 = scmp.lt.s32.totalorder %s152, 31
      %s154 = scalar_select %p153, %s152, 31
      %s155 = smul.addr %s154, 4
      %s156 = scalar_lea.vmem %s0, %s155
      %s157 = sadd.s32 %s17, %s18
      %s158 = smul.u32 16, %s157
      %p159 = scmp.lt.s32.totalorder %s17, 1
      %s160 = scalar_select %p159, %s17, 1
      %s161 = smul.addr %s160, 8
      %s162 = scalar_lea.vmem %s2, %s161
      %v164 = vld [vmem:[%s156] sm:$0xf]
      %v165 = vld [vmem:[%s156 + $0x4] sm:$0xf]
      %v166 = vld [vmem:[%s156 + $0x8] sm:$0xf]
      %v167 = vld [vmem:[%s156 + $0xc] sm:$0xf]
      %v168 = vld [vmem:[%s156 + $0x10] sm:$0xf]
      %v169 = vld [vmem:[%s156 + $0x14] sm:$0xf]
      %v170 = vld [vmem:[%s156 + $0x18] sm:$0xf]
      %v171 = vld [vmem:[%s156 + $0x1c] sm:$0xf]
      %v172 = vld [vmem:[%s156 + $0x20] sm:$0xf]
      %v173 = vld [vmem:[%s156 + $0x24] sm:$0xf]
      %v174 = vld [vmem:[%s156 + $0x28] sm:$0xf]
      %v175 = vld [vmem:[%s156 + $0x2c] sm:$0xf]
      %v176 = vld [vmem:[%s156 + $0x30] sm:$0xf]
      %v177 = vld [vmem:[%s156 + $0x34] sm:$0xf]
      %v178 = vld [vmem:[%s156 + $0x38] sm:$0xf]
      %v179 = vld [vmem:[%s156 + $0x3c] sm:$0xf]
      %v180 = vld [vmem:[%s1] sm:$0xf]
      %v181 = vld [vmem:[%s1 + $0x4] sm:$0xf]
      %v182 = vld [vmem:[%s1 + $0x8] sm:$0xf]
      %v183 = vld [vmem:[%s1 + $0xc] sm:$0xf]
      %v184 = vld [vmem:[%s1 + $0x10] sm:$0xf]
      %v185 = vld [vmem:[%s1 + $0x14] sm:$0xf]
      %v186 = vld [vmem:[%s1 + $0x18] sm:$0xf]
      %v187 = vld [vmem:[%s1 + $0x1c] sm:$0xf]
      %v204 = vunpack.c.l.b16 %v164
      %v205 = vunpack.c.l.b16 %v165
      %v206 = vunpack.c.l.b16 %v166
      %v207 = vunpack.c.l.b16 %v167
      %v208 = vunpack.c.l.b16 %v168
      %v209 = vunpack.c.l.b16 %v169
      %v210 = vunpack.c.l.b16 %v170
      %v211 = vunpack.c.l.b16 %v171
      %v212 = vunpack.c.l.b16 %v172
      %v213 = vunpack.c.l.b16 %v173
      %v214 = vunpack.c.l.b16 %v174
      %v215 = vunpack.c.l.b16 %v175
      %v216 = vunpack.c.l.b16 %v176
      %v217 = vunpack.c.l.b16 %v177
      %v218 = vunpack.c.l.b16 %v178
      %v219 = vunpack.c.l.b16 %v179
      %v220 = vpack.c.b16 %v205, %v204
      %v221 = vpack.c.b16 %v207, %v206
      %v222 = vpack.c.b16 %v209, %v208
      %v223 = vpack.c.b16 %v211, %v210
      %v224 = vpack.c.b16 %v213, %v212
      %v225 = vpack.c.b16 %v215, %v214
      %v226 = vpack.c.b16 %v217, %v216
      %v227 = vpack.c.b16 %v219, %v218
      %v236 = vunpack.c.l.b16 %v180
      %v237 = vunpack.c.l.b16 %v181
      %v238 = vunpack.c.l.b16 %v182
      %v239 = vunpack.c.l.b16 %v183
      %v240 = vunpack.c.l.b16 %v184
      %v241 = vunpack.c.l.b16 %v185
      %v242 = vunpack.c.l.b16 %v186
      %v243 = vunpack.c.l.b16 %v187
      %v244 = vpack.c.b16 %v237, %v236
      %v245 = vpack.c.b16 %v239, %v238
      %v246 = vpack.c.b16 %v241, %v240
      %v247 = vpack.c.b16 %v243, %v242
      %vm252 = vcmask 523264
      %v254 = vsel %vm252, %v220, 0
      %v257 = vsel %vm252, %v221, 0
      %v260 = vsel %vm252, %v222, 0
      %v263 = vsel %vm252, %v223, 0
      %v266 = vsel %vm252, %v224, 0
      %v269 = vsel %vm252, %v225, 0
      %v272 = vsel %vm252, %v226, 0
      %v275 = vsel %vm252, %v227, 0
      %277 = vmatprep.subr.bf16.mxu0 0
      %278 = vmatpush1.bf16.msra.mxu0 %v244
      %279 = vmatprep.subr.bf16.mxu0 0
      %280 = vmatpush1.bf16.msra.mxu0 %v245
      %281 = vmatprep.subr.bf16.mxu0 0
      %282 = vmatpush1.bf16.msra.mxu0 %v246
      %283 = vmatprep.subr.bf16.mxu0 0
      %284 = vmatpush1.bf16.msra.mxu0 %v247
      %285 = vmatprep.subr.bf16.mxu0 0
      %286 = vmatpush1.bf16.msra.mxu0 0
      %287 = vmatprep.subr.bf16.mxu0 0
      %288 = vmatpush1.bf16.msra.mxu0 0
      %289 = vmatprep.subr.bf16.mxu0 0
      %290 = vmatpush1.bf16.msra.mxu0 0
      %291 = vmatprep.subr.bf16.mxu0 0
      %292 = vmatpush1.bf16.msra.mxu0 0
      %293 = vmatprep.subr.bf16.mxu0 0
      %294 = vmatpush1.bf16.msra.mxu0 0
      %295 = vmatprep.subr.bf16.mxu0 0
      %296 = vmatpush1.bf16.msra.mxu0 0
      %297 = vmatprep.subr.bf16.mxu0 0
      %298 = vmatpush1.bf16.msra.mxu0 0
      %299 = vmatprep.subr.bf16.mxu0 0
      %300 = vmatpush1.bf16.msra.mxu0 0
      %301 = vmatprep.subr.bf16.mxu0 0
      %302 = vmatpush1.bf16.msra.mxu0 0
      %303 = vmatprep.subr.bf16.mxu0 0
      %304 = vmatpush1.bf16.msra.mxu0 0
      %305 = vmatprep.subr.bf16.mxu0 0
      %306 = vmatpush1.bf16.msra.mxu0 0
      %307 = vmatprep.subr.bf16.mxu0 0
      %308 = vmatpush1.bf16.msra.mxu0 0
      %309 = vmatprep.mubr.bf16.mxu0 0
      %310 = vmatmul.mubr.bf16.gmra.mrb[0].mxu0 %v254
      %v311 = vpop.f32.mrb[0].mxu0
      %v312 = vadd.f32 0.0, %v311
      %v313 = vpop.f32.mrb[0].mxu0
      %v314 = vpop.f32.mrb[0].mxu0
      %v315 = vadd.f32 0.0, %v314
      %v316 = vpop.f32.mrb[0].mxu0
      %317 = vmatprep.mubr.bf16.mxu0 0
      %318 = vmatmul.mubr.bf16.gmra.mrb[0].mxu0 %v257
      %v319 = vpop.f32.mrb[0].mxu0
      %v320 = vadd.f32 0.0, %v319
      %v321 = vpop.f32.mrb[0].mxu0
      %v322 = vpop.f32.mrb[0].mxu0
      %v323 = vadd.f32 0.0, %v322
      %v324 = vpop.f32.mrb[0].mxu0
      %325 = vmatprep.mubr.bf16.mxu0 0
      %326 = vmatmul.mubr.bf16.gmra.mrb[0].mxu0 %v260
      %v327 = vpop.f32.mrb[0].mxu0
      %v328 = vadd.f32 0.0, %v327
      %v329 = vpop.f32.mrb[0].mxu0
      %v330 = vpop.f32.mrb[0].mxu0
      %v331 = vadd.f32 0.0, %v330
      %v332 = vpop.f32.mrb[0].mxu0
      %333 = vmatprep.mubr.bf16.mxu0 0
      %334 = vmatmul.mubr.bf16.gmra.mrb[0].mxu0 %v263
      %v335 = vpop.f32.mrb[0].mxu0
      %v336 = vadd.f32 0.0, %v335
      %v337 = vpop.f32.mrb[0].mxu0
      %v338 = vpop.f32.mrb[0].mxu0
      %v339 = vadd.f32 0.0, %v338
      %v340 = vpop.f32.mrb[0].mxu0
      %341 = vmatprep.mubr.bf16.mxu0 0
      %342 = vmatmul.mubr.bf16.gmra.mrb[0].mxu0 %v266
      %v343 = vpop.f32.mrb[0].mxu0
      %v344 = vadd.f32 0.0, %v343
      %v345 = vpop.f32.mrb[0].mxu0
      %v346 = vpop.f32.mrb[0].mxu0
      %v347 = vadd.f32 0.0, %v346
      %v348 = vpop.f32.mrb[0].mxu0
      %349 = vmatprep.mubr.bf16.mxu0 0
      %350 = vmatmul.mubr.bf16.gmra.mrb[0].mxu0 %v269
      %v351 = vpop.f32.mrb[0].mxu0
      %v352 = vadd.f32 0.0, %v351
      %v353 = vpop.f32.mrb[0].mxu0
      %v354 = vpop.f32.mrb[0].mxu0
      %v355 = vadd.f32 0.0, %v354
      %v356 = vpop.f32.mrb[0].mxu0
      %357 = vmatprep.mubr.bf16.mxu0 0
      %358 = vmatmul.mubr.bf16.gmra.mrb[0].mxu0 %v272
      %v359 = vpop.f32.mrb[0].mxu0
      %v360 = vadd.f32 0.0, %v359
      %v361 = vpop.f32.mrb[0].mxu0
      %v362 = vpop.f32.mrb[0].mxu0
      %v363 = vadd.f32 0.0, %v362
      %v364 = vpop.f32.mrb[0].mxu0
      %365 = vmatprep.mubr.bf16.mxu0 0
      %366 = vmatmul.mubr.bf16.gmra.mrb[0].mxu0 %v275
      %v367 = vpop.f32.mrb[0].mxu0
      %v368 = vadd.f32 0.0, %v367
      %v369 = vpop.f32.mrb[0].mxu0
      %v370 = vpop.f32.mrb[0].mxu0
      %v371 = vadd.f32 0.0, %v370
      %v372 = vpop.f32.mrb[0].mxu0
      %373 = vdwg.mxu0
      %p374 = scmp.eq.s32.totalorder %s18, 0
      // Predicated region
      $region29: #{conv2d_block.2} parent=27 // pred_check
        %p375 = pneg %p374
      $region30: #{conv2d_block.2} parent=27 // pred_check_branch
        %377 = sbr.rel (%p375) target = $region32
      $region31: #{conv2d_block.2} parent=27 // pred_region
        %378 = vst [vmem:[%s162] sm:$0xff] 0.0
      $region32: #{conv2d_block.2} parent=27 // pred_fallthru
        _
      %v379 = vld [vmem:[%s162] sm:$0x1]
      %v380 = vadd.f32 %v312, %v315
      %v381 = vadd.f32 %v380, %v320
      %v382 = vadd.f32 %v381, %v323
      %v383 = vadd.f32 %v382, %v328
      %v384 = vadd.f32 %v383, %v331
      %v385 = vadd.f32 %v384, %v336
      %v386 = vadd.f32 %v385, %v339
      %v387 = vadd.f32 %v386, %v344
      %v388 = vadd.f32 %v387, %v347
      %v389 = vadd.f32 %v388, %v352
      %v390 = vadd.f32 %v389, %v355
      %v391 = vadd.f32 %v390, %v360
      %v392 = vadd.f32 %v391, %v363
      %v393 = vadd.f32 %v392, %v368
      %v394 = vadd.f32 %v393, %v371
      %v395 = vrot.slane %v394, 4
      %v396 = vadd.f32 %v394, %v395
      %v397 = vrot.slane %v396, 2
      %v398 = vadd.f32 %v396, %v397
      %v399 = vrot.slane %v398, 1
      %v400 = vadd.f32 %v398, %v399
      %v401 = vadd.f32 %v379, %v400
      %402 = vst [vmem:[%s162] sm:$0x1] %v401
      %v403 = vld [vmem:[%s162 + $0x1] sm:$0x1]
      %v404 = vmul.f32 %v312, %v312
      %v405 = vmul.f32 %v315, %v315
      %v406 = vmul.f32 %v320, %v320
      %v407 = vmul.f32 %v323, %v323
      %v408 = vmul.f32 %v328, %v328
      %v409 = vmul.f32 %v331, %v331
      %v410 = vmul.f32 %v336, %v336
      %v411 = vmul.f32 %v339, %v339
      %v412 = vmul.f32 %v344, %v344
      %v413 = vmul.f32 %v347, %v347
      %v414 = vmul.f32 %v352, %v352
      %v415 = vmul.f32 %v355, %v355
      %v416 = vmul.f32 %v360, %v360
      %v417 = vmul.f32 %v363, %v363
      %v418 = vmul.f32 %v368, %v368
      %v419 = vmul.f32 %v371, %v371
      %v420 = vadd.f32 %v404, %v405
      %v421 = vadd.f32 %v420, %v406
      %v422 = vadd.f32 %v421, %v407
      %v423 = vadd.f32 %v422, %v408
      %v424 = vadd.f32 %v423, %v409
      %v425 = vadd.f32 %v424, %v410
      %v426 = vadd.f32 %v425, %v411
      %v427 = vadd.f32 %v426, %v412
      %v428 = vadd.f32 %v427, %v413
      %v429 = vadd.f32 %v428, %v414
      %v430 = vadd.f32 %v429, %v415
      %v431 = vadd.f32 %v430, %v416
      %v432 = vadd.f32 %v431, %v417
      %v433 = vadd.f32 %v432, %v418
      %v434 = vadd.f32 %v433, %v419
      %v435 = vrot.slane %v434, 4
      %v436 = vadd.f32 %v434, %v435
      %v437 = vrot.slane %v436, 2
      %v438 = vadd.f32 %v436, %v437
      %v439 = vrot.slane %v438, 1
      %v440 = vadd.f32 %v438, %v439
      %v441 = vadd.f32 %v403, %v440
      %442 = vst [vmem:[%s162 + $0x1] sm:$0x1] %v441
      %p443 = scmp.lt.s32.totalorder %s17, 1
      %s444 = scalar_select %p443, %s17, 1
      %s445 = smul.addr %s444, 8
      %s446 = scalar_lea.vmem %s2, %s445
      // Predicated region
      $region33: #{conv2d_block.2} parent=27 // pred_check
        %p447 = pneg %p92
      $region34: #{conv2d_block.2} parent=27 // pred_check_branch
        %449 = sbr.rel (%p447) target = $region36
      $region35: #{conv2d_block.2} parent=27 // pred_region
        _
      $region36: #{conv2d_block.2} parent=27 // pred_fallthru
        _
    $region28: #{conv2d_block.2} parent=5 // pred_fallthru
      _
    %p450 = scmp.le.s32.totalorder 2, %s8
    // Predicated region
    $region37: #{conv2d_block.2} parent=5 // pred_check
      %p451 = pneg %p450
    $region38: #{conv2d_block.2} parent=5 // pred_check_branch
      %453 = sbr.rel (%p451) target = $region40
    $region39: #{conv2d_block.2} parent=5 // pred_region
      %s454 = ssub.s32 %s8, 2
      // Predicated region
      $region41: #{conv2d_block.2} parent=39 // pred_check
        %p455 = pneg %p98
      $region42: #{conv2d_block.2} parent=39 // pred_check_branch
        %457 = sbr.rel (%p455) target = $region44
      $region43: #{conv2d_block.2} parent=39 // pred_region
        %p458 = scmp.lt.s32.totalorder %s19, 1
        %s459 = scalar_select %p458, %s19, 1
        %s460 = smul.addr %s459, 8
        %s461 = scalar_lea.vmem %s2, %s460
      $region44: #{conv2d_block.2} parent=39 // pred_fallthru
        _
    $region40: #{conv2d_block.2} parent=5 // pred_fallthru
      _
  $region6: #{conv2d_block.2} parent=0 // loop_footer
    %s12 = sadd.s32 1, %s8
  $region7: #{conv2d_block.2} parent=0 // loop_footer_branch
    %7 = sbr.rel target = $region3
  $region8: #{conv2d_block.2} parent=0 // loop_exit
    _

</llo_original>
